<compile_context>
chip_gen: v7x
topology: tpu7x:2x2x1
jax: 0.10.0
libtpu: 0.0.40
codegen_flags: <defaults>
</compile_context>

<pallas_src>
import jax
import jax.numpy as jnp
from jax.experimental import pallas as pl
from jax.experimental.pallas import tpu as pltpu


# ----------------------------- Pallas kernel ------------------------------ #

def _make_iconv_kernel(H, WC):
    """Fused reversible-block kernel for one batch element.

    Layout: activations are (H, W*ch) 2-D slabs (channels fastest in lanes).
    A 3x3/pad=1 conv is   out = sum_{i=0..2} xpad[i:i+H, :] @ B_i
    where B_i is the banded (W*ch, W*cout) matrix built from the 3x3 weights
    (W-direction zero padding is implicit in the band structure; H-direction
    padding uses a small VMEM halo scratch).
    """

    def kernel(x1_ref, x2_ref, fw_ref, fb_ref, gw_ref, gb_ref,
               y1_ref, y2_ref, pad_ref):
        # Zero halo scratch (rows 0 and H+1 stay zero for both convs).
        pad_ref[...] = jnp.zeros_like(pad_ref)

        # ---------------- y1 = x1 + conv_f(x2) + b_f ---------------- #
        pad_ref[1:1 + H, :] = x2_ref[0]
        acc = jnp.zeros((H, WC), jnp.float32)
        for i in range(3):                      # 3 row shifts of the stencil
            acc = acc + jnp.dot(pad_ref[i:i + H, :], fw_ref[i],
                                preferred_element_type=jnp.float32)
        y1 = x1_ref[0].astype(jnp.float32) + acc + fb_ref[...]
        y1_ref[0] = y1.astype(y1_ref.dtype)

        # ------- y2 = x2 + conv_g(y1) + b_g  (y1 resident in VMEM) ---- #
        pad_ref[1:1 + H, :] = y1.astype(pad_ref.dtype)
        acc2 = jnp.zeros((H, WC), jnp.float32)
        for i in range(3):
            acc2 = acc2 + jnp.dot(pad_ref[i:i + H, :], gw_ref[i],
                                  preferred_element_type=jnp.float32)
        y2 = x2_ref[0].astype(jnp.float32) + acc2 + gb_ref[...]
        y2_ref[0] = y2.astype(y2_ref.dtype)

    return kernel


# ------------------------------- glue (JAX) -------------------------------- #

def _band_weights(w_oihw, W):
    """OIHW (cout, cin, 3, 3) -> (3, W*cin, W*cout) banded matrices.

    band[kh, wv*cin + ci, wo*cout + co] = w[co, ci, kh, wv - wo + 1]
    when 0 <= wv - wo + 1 < 3, else 0.  W-direction zero padding is implicit.
    """
    cout, cin, KH, KW = w_oihw.shape
    wt = jnp.transpose(w_oihw, (2, 3, 1, 0))          # (KH, KW, cin, cout)
    wv = jnp.arange(W)[:, None]
    wo = jnp.arange(W)[None, :]
    kw = wv - wo + (KW // 2)                          # (W, W)
    valid = (kw >= 0) & (kw < KW)
    kw_c = jnp.clip(kw, 0, KW - 1)
    m = wt[:, kw_c]                                   # (KH, W, W, cin, cout)
    m = jnp.where(valid[None, :, :, None, None], m, 0.0)
    return m.transpose(0, 1, 3, 2, 4).reshape(KH, W * cin, W * cout)


def iconv2d_forward(params, x_nchw, *, compute_dtype=jnp.bfloat16):
    """IConv2d(invert=True) forward. Input/output: NCHW, same as PyTorch."""
    n, c, h, w = x_nchw.shape
    assert c % 2 == 0
    ch = c // 2
    wc = w * ch
    hp = h + 2
    out_dtype = x_nchw.dtype

    # Split halves and go lane-dense: (N, H, W*ch), bf16 activations.
    x_nhwc = jnp.transpose(x_nchw, (0, 2, 3, 1))
    x1 = x_nhwc[..., :ch].reshape(n, h, wc).astype(compute_dtype)
    x2 = x_nhwc[..., ch:].reshape(n, h, wc).astype(compute_dtype)

    fw = _band_weights(params["f_w"], w).astype(compute_dtype)   # (3, wc, wc)
    gw = _band_weights(params["g_w"], w).astype(compute_dtype)
    fb = jnp.tile(params["f_b"], (w,)).reshape(1, wc).astype(jnp.float32)
    gb = jnp.tile(params["g_b"], (w,)).reshape(1, wc).astype(jnp.float32)

    kernel = _make_iconv_kernel(h, wc)

    act_bytes = n * h * wc
    flops = 2 * 3 * h * wc * wc * 2 * n                 # 2 convs, 3 shifts each
    bytes_accessed = (2 * act_bytes * 2                 # x1, x2 in bf16
                      + 2 * 3 * wc * wc * 2             # banded weights bf16
                      + 2 * wc * 4                      # biases f32
                      + 2 * act_bytes * jnp.dtype(out_dtype).itemsize)  # y1, y2

    y1, y2 = pl.pallas_call(
        kernel,
        out_shape=(jax.ShapeDtypeStruct((n, h, wc), out_dtype),
                   jax.ShapeDtypeStruct((n, h, wc), out_dtype)),
        grid_spec=pltpu.PrefetchScalarGridSpec(
            num_scalar_prefetch=0,
            grid=(n,),
            in_specs=[
                pl.BlockSpec((1, h, wc), lambda i: (i, 0, 0)),    # x1
                pl.BlockSpec((1, h, wc), lambda i: (i, 0, 0)),    # x2
                pl.BlockSpec((3, wc, wc), lambda i: (0, 0, 0)),   # f band (resident)
                pl.BlockSpec((1, wc), lambda i: (0, 0)),          # f bias
                pl.BlockSpec((3, wc, wc), lambda i: (0, 0, 0)),   # g band (resident)
                pl.BlockSpec((1, wc), lambda i: (0, 0)),          # g bias
            ],
            out_specs=[
                pl.BlockSpec((1, h, wc), lambda i: (i, 0, 0)),    # y1
                pl.BlockSpec((1, h, wc), lambda i: (i, 0, 0)),    # y2
            ],
            scratch_shapes=[pltpu.VMEM((hp, wc), compute_dtype)],  # H-halo pad
        ),
        compiler_params=pltpu.CompilerParams(
            dimension_semantics=("parallel",),
            vmem_limit_bytes=48 * 1024 * 1024,
        ),
        cost_estimate=pl.CostEstimate(
            flops=flops, transcendentals=0, bytes_accessed=bytes_accessed),
    )(x1, x2, fw, fb, gw, gb)

    y1 = y1.reshape(n, h, w, ch)
    y2 = y2.reshape(n, h, w, ch)
    y = jnp.concatenate([y1, y2], axis=-1)               # (N, H, W, C)
    return jnp.transpose(y, (0, 3, 1, 2))                # NCHW


# -------------------------- params / reference ----------------------------- #

def init_iconv2d_params(key, in_channels, out_channels, kernel_size=3):
    # Matches nn.Conv2d default init style (uniform +/- 1/sqrt(fan_in)).
    assert in_channels == out_channels and in_channels % 2 == 0
    ch = in_channels // 2
    bound = 1.0 / (ch * kernel_size * kernel_size) ** 0.5
    k1, k2, k3, k4 = jax.random.split(key, 4)
    shape_w = (ch, ch, kernel_size, kernel_size)          # OIHW, like PyTorch
    return {
        "f_w": jax.random.uniform(k1, shape_w, jnp.float32, -bound, bound),
        "f_b": jax.random.uniform(k2, (ch,), jnp.float32, -bound, bound),
        "g_w": jax.random.uniform(k3, shape_w, jnp.float32, -bound, bound),
        "g_b": jax.random.uniform(k4, (ch,), jnp.float32, -bound, bound),
    }


def _conv_ref(x_nchw, w, b):
    y = jax.lax.conv_general_dilated(
        x_nchw, w, window_strides=(1, 1), padding=((1, 1), (1, 1)),
        dimension_numbers=("NCHW", "OIHW", "NCHW"))
    return y + b.reshape(1, -1, 1, 1)


def iconv2d_ref(params, x_nchw):
    ch = x_nchw.shape[1] // 2
    x1, x2 = x_nchw[:, :ch], x_nchw[:, ch:]
    y1 = x1 + _conv_ref(x2, params["f_w"], params["f_b"])
    y2 = x2 + _conv_ref(y1, params["g_w"], params["g_b"])
    return jnp.concatenate([y1, y2], axis=1)


if __name__ == "__main__":
    key = jax.random.PRNGKey(0)
    k_param, k_x = jax.random.split(key)

    N, C, H, W = 2, 16, 16, 16          # in_channels == out_channels == 16
    params = init_iconv2d_params(k_param, C, C, kernel_size=3)
    x = jax.random.normal(k_x, (N, C, H, W), jnp.float32)

    out = jax.jit(iconv2d_forward)(params, x)
    out = jax.block_until_ready(out)

    ref = iconv2d_ref(params, x)
    assert out.shape == (N, C, H, W)
    # bf16 activations/weights with f32 accumulation -> loose-ish tolerance.
    assert jnp.allclose(out, ref, atol=5e-2, rtol=5e-2), (
        float(jnp.max(jnp.abs(out - ref))))

    print("KERNEL_OK")
</pallas_src>

<mosaic_0001>
module attributes {stable_mosaic.version = 11 : i64} {
  func.func @kernel(%arg0: i32, %arg1: memref<1x16x128xbf16, #tpu.memory_space<vmem>>, %arg2: memref<1x16x128xbf16, #tpu.memory_space<vmem>>, %arg3: memref<3x128x128xbf16, #tpu.memory_space<vmem>>, %arg4: memref<1x128xf32, #tpu.memory_space<vmem>>, %arg5: memref<3x128x128xbf16, #tpu.memory_space<vmem>>, %arg6: memref<1x128xf32, #tpu.memory_space<vmem>>, %arg7: memref<1x16x128xf32, #tpu.memory_space<vmem>>, %arg8: memref<1x16x128xf32, #tpu.memory_space<vmem>>, %arg9: memref<18x128xbf16, #tpu.memory_space<vmem>>) attributes {dimension_semantics = [#tpu.dimension_semantics<parallel>], iteration_bounds = array<i64: 2>, scalar_prefetch = 0 : i64, scratch_operands = 1 : i64, tpu.core_type = #tpu.core_type<tc>, window_params = [{transform_indices = @transform_0, window_bounds = array<i64: 1, 16, 128>}, {transform_indices = @transform_1, window_bounds = array<i64: 1, 16, 128>}, {pipeline_mode = #tpu.pipeline_mode<synchronous>, transform_indices = @transform_2, window_bounds = array<i64: 3, 128, 128>}, {pipeline_mode = #tpu.pipeline_mode<synchronous>, transform_indices = @transform_3, window_bounds = array<i64: 1, 128>}, {pipeline_mode = #tpu.pipeline_mode<synchronous>, transform_indices = @transform_4, window_bounds = array<i64: 3, 128, 128>}, {pipeline_mode = #tpu.pipeline_mode<synchronous>, transform_indices = @transform_5, window_bounds = array<i64: 1, 128>}, {transform_indices = @transform_6, window_bounds = array<i64: 1, 16, 128>}, {transform_indices = @transform_7, window_bounds = array<i64: 1, 16, 128>}]} {
    %cst = arith.constant 0.000000e+00 : bf16
    %0 = vector.broadcast %cst : bf16 to vector<18x128xbf16>
    %c0 = arith.constant 0 : index
    %c0_0 = arith.constant 0 : index
    %1 = vector.load %arg9[%c0, %c0_0] : memref<18x128xbf16, #tpu.memory_space<vmem>>, vector<18x128xbf16>
    tpu.vector_store %arg9[%c0, %c0_0], %0 {strides = array<i32>} : memref<18x128xbf16, #tpu.memory_space<vmem>>, vector<18x128xbf16>,
    %c0_1 = arith.constant 0 : index
    %c0_2 = arith.constant 0 : index
    %c0_3 = arith.constant 0 : index
    %2 = vector.load %arg2[%c0_1, %c0_2, %c0_3] : memref<1x16x128xbf16, #tpu.memory_space<vmem>>, vector<1x16x128xbf16>
    %3 = vector.shape_cast %2 : vector<1x16x128xbf16> to vector<16x128xbf16>
    %c1 = arith.constant 1 : index
    %c0_4 = arith.constant 0 : index
    %4 = vector.load %arg9[%c1, %c0_4] : memref<18x128xbf16, #tpu.memory_space<vmem>>, vector<16x128xbf16>
    tpu.vector_store %arg9[%c1, %c0_4], %3 {strides = array<i32>} : memref<18x128xbf16, #tpu.memory_space<vmem>>, vector<16x128xbf16>,
    %cst_5 = arith.constant 0.000000e+00 : f32
    %5 = vector.broadcast %cst_5 : f32 to vector<16x128xf32>
    %c0_6 = arith.constant 0 : index
    %c0_7 = arith.constant 0 : index
    %6 = vector.load %arg9[%c0_6, %c0_7] : memref<18x128xbf16, #tpu.memory_space<vmem>>, vector<16x128xbf16>
    %c0_8 = arith.constant 0 : index
    %c0_9 = arith.constant 0 : index
    %c0_10 = arith.constant 0 : index
    %7 = vector.load %arg3[%c0_8, %c0_9, %c0_10] : memref<3x128x128xbf16, #tpu.memory_space<vmem>>, vector<1x128x128xbf16>
    %8 = vector.shape_cast %7 : vector<1x128x128xbf16> to vector<128x128xbf16>
    %cst_11 = arith.constant dense<0.000000e+00> : vector<16x128xf32>
    %9 = tpu.matmul %6, %8, %cst_11 {dimension_numbers = #tpu.dot_dimension_numbers<[1], [0], [0], [1], [0, 0, 1, 1], [], []>} : vector<16x128xbf16>, vector<128x128xbf16>, vector<16x128xf32> -> vector<16x128xf32>
    %10 = arith.addf %5, %9 : vector<16x128xf32>
    %c1_12 = arith.constant 1 : index
    %c0_13 = arith.constant 0 : index
    %11 = vector.load %arg9[%c1_12, %c0_13] : memref<18x128xbf16, #tpu.memory_space<vmem>>, vector<16x128xbf16>
    %c1_14 = arith.constant 1 : index
    %c0_15 = arith.constant 0 : index
    %c0_16 = arith.constant 0 : index
    %12 = vector.load %arg3[%c1_14, %c0_15, %c0_16] : memref<3x128x128xbf16, #tpu.memory_space<vmem>>, vector<1x128x128xbf16>
    %13 = vector.shape_cast %12 : vector<1x128x128xbf16> to vector<128x128xbf16>
    %cst_17 = arith.constant dense<0.000000e+00> : vector<16x128xf32>
    %14 = tpu.matmul %11, %13, %cst_17 {dimension_numbers = #tpu.dot_dimension_numbers<[1], [0], [0], [1], [0, 0, 1, 1], [], []>} : vector<16x128xbf16>, vector<128x128xbf16>, vector<16x128xf32> -> vector<16x128xf32>
    %15 = arith.addf %10, %14 : vector<16x128xf32>
    %c2 = arith.constant 2 : index
    %c0_18 = arith.constant 0 : index
    %16 = vector.load %arg9[%c2, %c0_18] : memref<18x128xbf16, #tpu.memory_space<vmem>>, vector<16x128xbf16>
    %c2_19 = arith.constant 2 : index
    %c0_20 = arith.constant 0 : index
    %c0_21 = arith.constant 0 : index
    %17 = vector.load %arg3[%c2_19, %c0_20, %c0_21] : memref<3x128x128xbf16, #tpu.memory_space<vmem>>, vector<1x128x128xbf16>
    %18 = vector.shape_cast %17 : vector<1x128x128xbf16> to vector<128x128xbf16>
    %cst_22 = arith.constant dense<0.000000e+00> : vector<16x128xf32>
    %19 = tpu.matmul %16, %18, %cst_22 {dimension_numbers = #tpu.dot_dimension_numbers<[1], [0], [0], [1], [0, 0, 1, 1], [], []>} : vector<16x128xbf16>, vector<128x128xbf16>, vector<16x128xf32> -> vector<16x128xf32>
    %20 = arith.addf %15, %19 : vector<16x128xf32>
    %c0_23 = arith.constant 0 : index
    %c0_24 = arith.constant 0 : index
    %c0_25 = arith.constant 0 : index
    %21 = vector.load %arg1[%c0_23, %c0_24, %c0_25] : memref<1x16x128xbf16, #tpu.memory_space<vmem>>, vector<1x16x128xbf16>
    %22 = vector.shape_cast %21 : vector<1x16x128xbf16> to vector<16x128xbf16>
    %23 = arith.extf %22 : vector<16x128xbf16> to vector<16x128xf32>
    %24 = arith.addf %23, %20 : vector<16x128xf32>
    %c0_26 = arith.constant 0 : index
    %c0_27 = arith.constant 0 : index
    %25 = vector.load %arg4[%c0_26, %c0_27] : memref<1x128xf32, #tpu.memory_space<vmem>>, vector<1x128xf32>
    %26 = vector.broadcast %25 : vector<1x128xf32> to vector<16x128xf32>
    %27 = arith.addf %24, %26 : vector<16x128xf32>
    %c0_28 = arith.constant 0 : index
    %c0_29 = arith.constant 0 : index
    %c0_30 = arith.constant 0 : index
    %28 = vector.load %arg7[%c0_28, %c0_29, %c0_30] : memref<1x16x128xf32, #tpu.memory_space<vmem>>, vector<1x16x128xf32>
    %29 = vector.shape_cast %28 : vector<1x16x128xf32> to vector<16x128xf32>
    %30 = vector.shape_cast %27 : vector<16x128xf32> to vector<1x16x128xf32>
    tpu.vector_store %arg7[%c0_28, %c0_29, %c0_30], %30 {strides = array<i32>} : memref<1x16x128xf32, #tpu.memory_space<vmem>>, vector<1x16x128xf32>,
    %31 = arith.truncf %27 : vector<16x128xf32> to vector<16x128xbf16>
    %c1_31 = arith.constant 1 : index
    %c0_32 = arith.constant 0 : index
    %32 = vector.load %arg9[%c1_31, %c0_32] : memref<18x128xbf16, #tpu.memory_space<vmem>>, vector<16x128xbf16>
    tpu.vector_store %arg9[%c1_31, %c0_32], %31 {strides = array<i32>} : memref<18x128xbf16, #tpu.memory_space<vmem>>, vector<16x128xbf16>,
    %cst_33 = arith.constant 0.000000e+00 : f32
    %33 = vector.broadcast %cst_33 : f32 to vector<16x128xf32>
    %c0_34 = arith.constant 0 : index
    %c0_35 = arith.constant 0 : index
    %34 = vector.load %arg9[%c0_34, %c0_35] : memref<18x128xbf16, #tpu.memory_space<vmem>>, vector<16x128xbf16>
    %c0_36 = arith.constant 0 : index
    %c0_37 = arith.constant 0 : index
    %c0_38 = arith.constant 0 : index
    %35 = vector.load %arg5[%c0_36, %c0_37, %c0_38] : memref<3x128x128xbf16, #tpu.memory_space<vmem>>, vector<1x128x128xbf16>
    %36 = vector.shape_cast %35 : vector<1x128x128xbf16> to vector<128x128xbf16>
    %cst_39 = arith.constant dense<0.000000e+00> : vector<16x128xf32>
    %37 = tpu.matmul %34, %36, %cst_39 {dimension_numbers = #tpu.dot_dimension_numbers<[1], [0], [0], [1], [0, 0, 1, 1], [], []>} : vector<16x128xbf16>, vector<128x128xbf16>, vector<16x128xf32> -> vector<16x128xf32>
    %38 = arith.addf %33, %37 : vector<16x128xf32>
    %c1_40 = arith.constant 1 : index
    %c0_41 = arith.constant 0 : index
    %39 = vector.load %arg9[%c1_40, %c0_41] : memref<18x128xbf16, #tpu.memory_space<vmem>>, vector<16x128xbf16>
    %c1_42 = arith.constant 1 : index
    %c0_43 = arith.constant 0 : index
    %c0_44 = arith.constant 0 : index
    %40 = vector.load %arg5[%c1_42, %c0_43, %c0_44] : memref<3x128x128xbf16, #tpu.memory_space<vmem>>, vector<1x128x128xbf16>
    %41 = vector.shape_cast %40 : vector<1x128x128xbf16> to vector<128x128xbf16>
    %cst_45 = arith.constant dense<0.000000e+00> : vector<16x128xf32>
    %42 = tpu.matmul %39, %41, %cst_45 {dimension_numbers = #tpu.dot_dimension_numbers<[1], [0], [0], [1], [0, 0, 1, 1], [], []>} : vector<16x128xbf16>, vector<128x128xbf16>, vector<16x128xf32> -> vector<16x128xf32>
    %43 = arith.addf %38, %42 : vector<16x128xf32>
    %c2_46 = arith.constant 2 : index
    %c0_47 = arith.constant 0 : index
    %44 = vector.load %arg9[%c2_46, %c0_47] : memref<18x128xbf16, #tpu.memory_space<vmem>>, vector<16x128xbf16>
    %c2_48 = arith.constant 2 : index
    %c0_49 = arith.constant 0 : index
    %c0_50 = arith.constant 0 : index
    %45 = vector.load %arg5[%c2_48, %c0_49, %c0_50] : memref<3x128x128xbf16, #tpu.memory_space<vmem>>, vector<1x128x128xbf16>
    %46 = vector.shape_cast %45 : vector<1x128x128xbf16> to vector<128x128xbf16>
    %cst_51 = arith.constant dense<0.000000e+00> : vector<16x128xf32>
    %47 = tpu.matmul %44, %46, %cst_51 {dimension_numbers = #tpu.dot_dimension_numbers<[1], [0], [0], [1], [0, 0, 1, 1], [], []>} : vector<16x128xbf16>, vector<128x128xbf16>, vector<16x128xf32> -> vector<16x128xf32>
    %48 = arith.addf %43, %47 : vector<16x128xf32>
    %c0_52 = arith.constant 0 : index
    %c0_53 = arith.constant 0 : index
    %c0_54 = arith.constant 0 : index
    %49 = vector.load %arg2[%c0_52, %c0_53, %c0_54] : memref<1x16x128xbf16, #tpu.memory_space<vmem>>, vector<1x16x128xbf16>
    %50 = vector.shape_cast %49 : vector<1x16x128xbf16> to vector<16x128xbf16>
    %51 = arith.extf %50 : vector<16x128xbf16> to vector<16x128xf32>
    %52 = arith.addf %51, %48 : vector<16x128xf32>
    %c0_55 = arith.constant 0 : index
    %c0_56 = arith.constant 0 : index
    %53 = vector.load %arg6[%c0_55, %c0_56] : memref<1x128xf32, #tpu.memory_space<vmem>>, vector<1x128xf32>
    %54 = vector.broadcast %53 : vector<1x128xf32> to vector<16x128xf32>
    %55 = arith.addf %52, %54 : vector<16x128xf32>
    %c0_57 = arith.constant 0 : index
    %c0_58 = arith.constant 0 : index
    %c0_59 = arith.constant 0 : index
    %56 = vector.load %arg8[%c0_57, %c0_58, %c0_59] : memref<1x16x128xf32, #tpu.memory_space<vmem>>, vector<1x16x128xf32>
    %57 = vector.shape_cast %56 : vector<1x16x128xf32> to vector<16x128xf32>
    %58 = vector.shape_cast %55 : vector<16x128xf32> to vector<1x16x128xf32>
    tpu.vector_store %arg8[%c0_57, %c0_58, %c0_59], %58 {strides = array<i32>} : memref<1x16x128xf32, #tpu.memory_space<vmem>>, vector<1x16x128xf32>,
    return
  }
  func.func @transform_0(%arg0: i32) -> (i32, i32, i32) {
    %c0_i32 = arith.constant 0 : i32
    %c0_i32_0 = arith.constant 0 : i32
    %c0_i32_1 = arith.constant 0 : i32
    return %arg0, %c0_i32, %c0_i32_0 : i32, i32, i32
  }
  func.func @transform_1(%arg0: i32) -> (i32, i32, i32) {
    %c0_i32 = arith.constant 0 : i32
    %c0_i32_0 = arith.constant 0 : i32
    %c0_i32_1 = arith.constant 0 : i32
    return %arg0, %c0_i32, %c0_i32_0 : i32, i32, i32
  }
  func.func @transform_2(%arg0: i32) -> (i32, i32, i32) {
    %c0_i32 = arith.constant 0 : i32
    %c0_i32_0 = arith.constant 0 : i32
    %c0_i32_1 = arith.constant 0 : i32
    %c0_i32_2 = arith.constant 0 : i32
    return %c0_i32, %c0_i32_0, %c0_i32_1 : i32, i32, i32
  }
  func.func @transform_3(%arg0: i32) -> (i32, i32) {
    %c0_i32 = arith.constant 0 : i32
    %c0_i32_0 = arith.constant 0 : i32
    %c0_i32_1 = arith.constant 0 : i32
    return %c0_i32, %c0_i32_0 : i32, i32
  }
  func.func @transform_4(%arg0: i32) -> (i32, i32, i32) {
    %c0_i32 = arith.constant 0 : i32
    %c0_i32_0 = arith.constant 0 : i32
    %c0_i32_1 = arith.constant 0 : i32
    %c0_i32_2 = arith.constant 0 : i32
    return %c0_i32, %c0_i32_0, %c0_i32_1 : i32, i32, i32
  }
  func.func @transform_5(%arg0: i32) -> (i32, i32) {
    %c0_i32 = arith.constant 0 : i32
    %c0_i32_0 = arith.constant 0 : i32
    %c0_i32_1 = arith.constant 0 : i32
    return %c0_i32, %c0_i32_0 : i32, i32
  }
  func.func @transform_6(%arg0: i32) -> (i32, i32, i32) {
    %c0_i32 = arith.constant 0 : i32
    %c0_i32_0 = arith.constant 0 : i32
    %c0_i32_1 = arith.constant 0 : i32
    return %arg0, %c0_i32, %c0_i32_0 : i32, i32, i32
  }
  func.func @transform_7(%arg0: i32) -> (i32, i32, i32) {
    %c0_i32 = arith.constant 0 : i32
    %c0_i32_0 = arith.constant 0 : i32
    %c0_i32_1 = arith.constant 0 : i32
    return %arg0, %c0_i32, %c0_i32_0 : i32, i32, i32
  }
}

</mosaic_0001>

<llo_original>
// kernel: tile.13
$region0: #{tile.13}
  #allocation0 [shape = 's32[1]{0}', space=sflag, size = 0x4, scoped, tag = 'scoped memory for tile.13']
  %s0 = inlined_call_operand.vmem [shape: f32[8], index: 0, kind: input, shape index: {}]
  %s1 = inlined_call_operand.vmem [shape: f32[16,8], index: 1, kind: output, shape index: {}]
  // Predicated region
  $region2: #{tile.13} parent=0 // pred_check
    _
  $region3: #{tile.13} parent=0 // pred_check_branch
    %3 = sbr.rel (0) target = $region5
  $region4: #{tile.13} parent=0 // pred_region
    _
  $region5: #{tile.13} parent=0 // pred_fallthru
    _
  %v4 = vld [vmem:[%s0] ss:$0 sm:$0xff]
  %5 = vst [vmem:[%s1] sm:$0xff] %v4
  %s6 = scalar_lea.vmem %s1, 8
  %7 = vst [vmem:[%s6] sm:$0xff] %v4

// kernel: tile.14
$region0: #{tile.14}
  %s0 = inlined_call_operand.vmem [shape: f32[16,8], index: 0, kind: input, shape index: {}]
  %s1 = inlined_call_operand.vmem [shape: f32[1,128], index: 1, kind: output, shape index: {}]
  $region1: #{tile.14} parent=0
    #allocation0 [shape = 'u8[4096]{0}', space=vmem, size = 0x1000, scoped, tag = 'scoped mem for output reshape']
    %v2 = vld [vmem:[%s0] sm:$0x1]
    %vm3 = vcmask 64512
    %4 = vst.msk [vmem:[#allocation0] sm:$0x1] %vm3, %v2
    %s5 = scalar_lea.vmem %s0, 15
    %v6 = vld [vmem:[%s5] sm:$0x1]
    %7 = vrot.lane.b32.xlu0 %v6, 120
    %v8 = vpop.permute.xlu0 %7
    %vm9 = vcmask 1048512
    %10 = vst.msk [vmem:[#allocation0] sm:$0x1] %vm9, %v8
    %s11 = scalar_lea.vmem %s0, 14
    %v12 = vld [vmem:[%s11] sm:$0x1]
    %13 = vrot.lane.b32.xlu0 %v12, 112
    %v14 = vpop.permute.xlu0 %13
    %vm15 = vcmask 982912
    %16 = vst.msk [vmem:[#allocation0] sm:$0x1] %vm15, %v14
    %s17 = scalar_lea.vmem %s0, 13
    %v18 = vld [vmem:[%s17] sm:$0x1]
    %19 = vrot.lane.b32.xlu0 %v18, 104
    %v20 = vpop.permute.xlu0 %19
    %vm21 = vcmask 917312
    %22 = vst.msk [vmem:[#allocation0] sm:$0x1] %vm21, %v20
    %s23 = scalar_lea.vmem %s0, 12
    %v24 = vld [vmem:[%s23] sm:$0x1]
    %25 = vrot.lane.b32.xlu0 %v24, 96
    %v26 = vpop.permute.xlu0 %25
    %vm27 = vcmask 851712
    %28 = vst.msk [vmem:[#allocation0] sm:$0x1] %vm27, %v26
    %s29 = scalar_lea.vmem %s0, 11
    %v30 = vld [vmem:[%s29] sm:$0x1]
    %31 = vrot.lane.b32.xlu0 %v30, 88
    %v32 = vpop.permute.xlu0 %31
    %vm33 = vcmask 786112
    %34 = vst.msk [vmem:[#allocation0] sm:$0x1] %vm33, %v32
    %s35 = scalar_lea.vmem %s0, 10
    %v36 = vld [vmem:[%s35] sm:$0x1]
    %37 = vrot.lane.b32.xlu0 %v36, 80
    %v38 = vpop.permute.xlu0 %37
    %vm39 = vcmask 720512
    %40 = vst.msk [vmem:[#allocation0] sm:$0x1] %vm39, %v38
    %s41 = scalar_lea.vmem %s0, 9
    %v42 = vld [vmem:[%s41] sm:$0x1]
    %43 = vrot.lane.b32.xlu0 %v42, 72
    %v44 = vpop.permute.xlu0 %43
    %vm45 = vcmask 654912
    %46 = vst.msk [vmem:[#allocation0] sm:$0x1] %vm45, %v44
    %s47 = scalar_lea.vmem %s0, 8
    %v48 = vld [vmem:[%s47] sm:$0x1]
    %49 = vrot.lane.b32.xlu0 %v48, 64
    %v50 = vpop.permute.xlu0 %49
    %vm51 = vcmask 589312
    %52 = vst.msk [vmem:[#allocation0] sm:$0x1] %vm51, %v50
    %s53 = scalar_lea.vmem %s0, 7
    %v54 = vld [vmem:[%s53] sm:$0x1]
    %55 = vrot.lane.b32.xlu0 %v54, 56
    %v56 = vpop.permute.xlu0 %55
    %vm57 = vcmask 523712
    %58 = vst.msk [vmem:[#allocation0] sm:$0x1] %vm57, %v56
    %s59 = scalar_lea.vmem %s0, 6
    %v60 = vld [vmem:[%s59] sm:$0x1]
    %61 = vrot.lane.b32.xlu0 %v60, 48
    %v62 = vpop.permute.xlu0 %61
    %vm63 = vcmask 458112
    %64 = vst.msk [vmem:[#allocation0] sm:$0x1] %vm63, %v62
    %s65 = scalar_lea.vmem %s0, 5
    %v66 = vld [vmem:[%s65] sm:$0x1]
    %67 = vrot.lane.b32.xlu0 %v66, 40
    %v68 = vpop.permute.xlu0 %67
    %vm69 = vcmask 392512
    %70 = vst.msk [vmem:[#allocation0] sm:$0x1] %vm69, %v68
    %s71 = scalar_lea.vmem %s0, 4
    %v72 = vld [vmem:[%s71] sm:$0x1]
    %73 = vrot.lane.b32.xlu0 %v72, 32
    %v74 = vpop.permute.xlu0 %73
    %vm75 = vcmask 326912
    %76 = vst.msk [vmem:[#allocation0] sm:$0x1] %vm75, %v74
    %s77 = scalar_lea.vmem %s0, 3
    %v78 = vld [vmem:[%s77] sm:$0x1]
    %79 = vrot.lane.b32.xlu0 %v78, 24
    %v80 = vpop.permute.xlu0 %79
    %vm81 = vcmask 261312
    %82 = vst.msk [vmem:[#allocation0] sm:$0x1] %vm81, %v80
    %s83 = scalar_lea.vmem %s0, 2
    %v84 = vld [vmem:[%s83] sm:$0x1]
    %85 = vrot.lane.b32.xlu0 %v84, 16
    %v86 = vpop.permute.xlu0 %85
    %vm87 = vcmask 195712
    %88 = vst.msk [vmem:[#allocation0] sm:$0x1] %vm87, %v86
    %s89 = scalar_lea.vmem %s0, 1
    %v90 = vld [vmem:[%s89] sm:$0x1]
    %91 = vrot.lane.b32.xlu0 %v90, 8
    %v92 = vpop.permute.xlu0 %91
    %vm93 = vcmask 130112
    %94 = vst.msk [vmem:[#allocation0] sm:$0x1] %vm93, %v92
    %s96 = sshllo.u32 0, 1
    %v98 = vld [vmem:[#allocation0] sm:%s96]
    %s99 = sshllo.u32 0, 1
    %100 = vst [vmem:[%s1] sm:%s99] %v98

// kernel: iconv2d_forward.1
$region0: #{iconv2d_forward.1}
  #allocation0 [shape = 'u32[]', space=smem, size = 0x4, offset = 0x4, fixed_abs, tag = 'smem constant byte address 0x4 - core index']
  #allocation1 [shape = 'u32[144,128]{1,0:T(1,128)}', space=vmem, size = 0x12000, scoped, tag = 'internal scratch']
  #allocation2 [shape = 'bf16[18,128]{1,0:T(8,128)(2,1)}', space=vmem, size = 0x1800, scoped, tag = 'scratch operand']
  %s0 = inlined_call_operand.vmem [shape: bf16[2,16,128], index: 0, kind: input, shape index: {}]
  %s1 = inlined_call_operand.vmem [shape: bf16[2,16,128], index: 1, kind: input, shape index: {}]
  %s2 = inlined_call_operand.vmem [shape: bf16[3,128,128], index: 2, kind: input, shape index: {}]
  %s3 = inlined_call_operand.vmem [shape: f32[1,128], index: 3, kind: input, shape index: {}]
  %s4 = inlined_call_operand.vmem [shape: bf16[3,128,128], index: 4, kind: input, shape index: {}]
  %s5 = inlined_call_operand.vmem [shape: f32[1,128], index: 5, kind: input, shape index: {}]
  %s6 = inlined_call_operand.vmem [shape: f32[2,16,128], index: 6, kind: output, shape index: {0}]
  %s7 = inlined_call_operand.vmem [shape: f32[2,16,128], index: 7, kind: output, shape index: {1}]
  %8 = xla_tuple %s6, %s7
  %s9 = sld [smem:[#allocation0]]
  $region65: #{iconv2d_forward.1} parent=0
    _
  %s11 = ssub.s32 1, %s9
  %s12 = scalar_select 0, %s11, %s9
  loop: start=0, step=1, limit=4
  $region2: #{iconv2d_forward.1} parent=0 // loop_pre_header
    _
  $region3: #{iconv2d_forward.1} parent=0 // loop_header
    %s14 = sphi 0, %s18
    %p15 = scmp.ge.s32.totalorder %s14, 4
    %s24 = sphi 0, %s26
    %s27 = sphi 0, %s24
    %s28 = sphi 0, %s27
    %s44 = sphi 0, %s28
    %s50 = sphi 0, %s52
    %s53 = sphi 0, %s50
    %s54 = sphi 0, %s53
    %s70 = sphi 0, %s54
    %s74 = sphi 0, %s74
    %s76 = sphi 0, %s74
    %s77 = sphi 0, %s76
    %s91 = sphi 0, %s77
    %s95 = sphi 0, %s95
    %s97 = sphi 0, %s95
    %s98 = sphi 0, %s97
    %s112 = sphi 0, %s98
    %s116 = sphi 0, %s116
    %s118 = sphi 0, %s116
    %s119 = sphi 0, %s118
    %s133 = sphi 0, %s119
    %s137 = sphi 0, %s137
    %s139 = sphi 0, %s137
    %s140 = sphi 0, %s139
    %s154 = sphi 0, %s140
    %s160 = sphi 0, %s162
    %s163 = sphi 0, %s160
    %s164 = sphi 0, %s163
    %s180 = sphi 0, %s164
    %s186 = sphi 0, %s188
    %s189 = sphi 0, %s186
    %s190 = sphi 0, %s189
    %s206 = sphi 0, %s190
  $region4: #{iconv2d_forward.1} parent=0 // loop_header_branch
    %17 = sbr.rel (%p15) target = $region8
  $region5: #{iconv2d_forward.1} parent=0 // loop_body
    %s19 = ssub.s32 %s14, 1
    %s20 = ssub.s32 %s14, 2
    %s21 = sadd.s32 %s14, 1
    %s22 = ssub.s32 %s14, %s21
    %p23 = scmp.eq.s32.totalorder %s22, 0
    %s25 = sadd.s32 %s24, 1
    %s26 = scalar_select %p23, %s24, %s25
    %p29 = pneg %p23
    %p30 = scmp.eq.s32.totalorder %s14, 1
    %p31 = por %p29, %p30
    %p32 = scmp.ne.s32.totalorder %s24, %s27
    %p33 = scmp.eq.s32.totalorder %s14, 0
    %p34 = por %p32, %p33
    %p35 = scmp.ne.s32.totalorder %s24, %s27
    %p36 = scmp.eq.s32.totalorder %s19, 1
    %p37 = por %p35, %p36
    %p38 = scmp.ne.s32.totalorder %s27, %s28
    %p39 = scmp.eq.s32.totalorder %s19, 0
    %p40 = por %p38, %p39
    %p41 = scmp.ne.s32.totalorder %s27, %s28
    %p42 = scmp.eq.s32.totalorder %s20, 1
    %p43 = por %p41, %p42
    %p45 = scmp.ne.s32.totalorder %s28, %s44
    %p46 = scmp.eq.s32.totalorder %s20, 0
    %p47 = por %p45, %p46
    %s48 = ssub.s32 %s14, %s21
    %p49 = scmp.eq.s32.totalorder %s48, 0
    %s51 = sadd.s32 %s50, 1
    %s52 = scalar_select %p49, %s50, %s51
    %p55 = pneg %p49
    %p56 = scmp.eq.s32.totalorder %s14, 1
    %p57 = por %p55, %p56
    %p58 = scmp.ne.s32.totalorder %s50, %s53
    %p59 = scmp.eq.s32.totalorder %s14, 0
    %p60 = por %p58, %p59
    %p61 = scmp.ne.s32.totalorder %s50, %s53
    %p62 = scmp.eq.s32.totalorder %s19, 1
    %p63 = por %p61, %p62
    %p64 = scmp.ne.s32.totalorder %s53, %s54
    %p65 = scmp.eq.s32.totalorder %s19, 0
    %p66 = por %p64, %p65
    %p67 = scmp.ne.s32.totalorder %s53, %s54
    %p68 = scmp.eq.s32.totalorder %s20, 1
    %p69 = por %p67, %p68
    %p71 = scmp.ne.s32.totalorder %s54, %s70
    %p72 = scmp.eq.s32.totalorder %s20, 0
    %p73 = por %p71, %p72
    %s75 = sadd.s32 %s74, 1
    %p78 = scmp.eq.s32.totalorder %s14, 1
    %p79 = scmp.ne.s32.totalorder %s74, %s76
    %p80 = scmp.eq.s32.totalorder %s14, 0
    %p81 = por %p79, %p80
    %p82 = scmp.ne.s32.totalorder %s74, %s76
    %p83 = scmp.eq.s32.totalorder %s19, 1
    %p84 = por %p82, %p83
    %p85 = scmp.ne.s32.totalorder %s76, %s77
    %p86 = scmp.eq.s32.totalorder %s19, 0
    %p87 = por %p85, %p86
    %p88 = scmp.ne.s32.totalorder %s76, %s77
    %p89 = scmp.eq.s32.totalorder %s20, 1
    %p90 = por %p88, %p89
    %p92 = scmp.ne.s32.totalorder %s77, %s91
    %p93 = scmp.eq.s32.totalorder %s20, 0
    %p94 = por %p92, %p93
    %s96 = sadd.s32 %s95, 1
    %p99 = scmp.eq.s32.totalorder %s14, 1
    %p100 = scmp.ne.s32.totalorder %s95, %s97
    %p101 = scmp.eq.s32.totalorder %s14, 0
    %p102 = por %p100, %p101
    %p103 = scmp.ne.s32.totalorder %s95, %s97
    %p104 = scmp.eq.s32.totalorder %s19, 1
    %p105 = por %p103, %p104
    %p106 = scmp.ne.s32.totalorder %s97, %s98
    %p107 = scmp.eq.s32.totalorder %s19, 0
    %p108 = por %p106, %p107
    %p109 = scmp.ne.s32.totalorder %s97, %s98
    %p110 = scmp.eq.s32.totalorder %s20, 1
    %p111 = por %p109, %p110
    %p113 = scmp.ne.s32.totalorder %s98, %s112
    %p114 = scmp.eq.s32.totalorder %s20, 0
    %p115 = por %p113, %p114
    %s117 = sadd.s32 %s116, 1
    %p120 = scmp.eq.s32.totalorder %s14, 1
    %p121 = scmp.ne.s32.totalorder %s116, %s118
    %p122 = scmp.eq.s32.totalorder %s14, 0
    %p123 = por %p121, %p122
    %p124 = scmp.ne.s32.totalorder %s116, %s118
    %p125 = scmp.eq.s32.totalorder %s19, 1
    %p126 = por %p124, %p125
    %p127 = scmp.ne.s32.totalorder %s118, %s119
    %p128 = scmp.eq.s32.totalorder %s19, 0
    %p129 = por %p127, %p128
    %p130 = scmp.ne.s32.totalorder %s118, %s119
    %p131 = scmp.eq.s32.totalorder %s20, 1
    %p132 = por %p130, %p131
    %p134 = scmp.ne.s32.totalorder %s119, %s133
    %p135 = scmp.eq.s32.totalorder %s20, 0
    %p136 = por %p134, %p135
    %s138 = sadd.s32 %s137, 1
    %p141 = scmp.eq.s32.totalorder %s14, 1
    %p142 = scmp.ne.s32.totalorder %s137, %s139
    %p143 = scmp.eq.s32.totalorder %s14, 0
    %p144 = por %p142, %p143
    %p145 = scmp.ne.s32.totalorder %s137, %s139
    %p146 = scmp.eq.s32.totalorder %s19, 1
    %p147 = por %p145, %p146
    %p148 = scmp.ne.s32.totalorder %s139, %s140
    %p149 = scmp.eq.s32.totalorder %s19, 0
    %p150 = por %p148, %p149
    %p151 = scmp.ne.s32.totalorder %s139, %s140
    %p152 = scmp.eq.s32.totalorder %s20, 1
    %p153 = por %p151, %p152
    %p155 = scmp.ne.s32.totalorder %s140, %s154
    %p156 = scmp.eq.s32.totalorder %s20, 0
    %p157 = por %p155, %p156
    %s158 = ssub.s32 %s14, %s21
    %p159 = scmp.eq.s32.totalorder %s158, 0
    %s161 = sadd.s32 %s160, 1
    %s162 = scalar_select %p159, %s160, %s161
    %p165 = pneg %p159
    %p166 = scmp.eq.s32.totalorder %s14, 1
    %p167 = por %p165, %p166
    %p168 = scmp.ne.s32.totalorder %s160, %s163
    %p169 = scmp.eq.s32.totalorder %s14, 0
    %p170 = por %p168, %p169
    %p171 = scmp.ne.s32.totalorder %s160, %s163
    %p172 = scmp.eq.s32.totalorder %s19, 1
    %p173 = por %p171, %p172
    %p174 = scmp.ne.s32.totalorder %s163, %s164
    %p175 = scmp.eq.s32.totalorder %s19, 0
    %p176 = por %p174, %p175
    %p177 = scmp.ne.s32.totalorder %s163, %s164
    %p178 = scmp.eq.s32.totalorder %s20, 1
    %p179 = por %p177, %p178
    %p181 = scmp.ne.s32.totalorder %s164, %s180
    %p182 = scmp.eq.s32.totalorder %s20, 0
    %p183 = por %p181, %p182
    %s184 = ssub.s32 %s14, %s21
    %p185 = scmp.eq.s32.totalorder %s184, 0
    %s187 = sadd.s32 %s186, 1
    %s188 = scalar_select %p185, %s186, %s187
    %p191 = pneg %p185
    %p192 = scmp.eq.s32.totalorder %s14, 1
    %p193 = por %p191, %p192
    %p194 = scmp.ne.s32.totalorder %s186, %s189
    %p195 = scmp.eq.s32.totalorder %s14, 0
    %p196 = por %p194, %p195
    %p197 = scmp.ne.s32.totalorder %s186, %s189
    %p198 = scmp.eq.s32.totalorder %s19, 1
    %p199 = por %p197, %p198
    %p200 = scmp.ne.s32.totalorder %s189, %s190
    %p201 = scmp.eq.s32.totalorder %s19, 0
    %p202 = por %p200, %p201
    %p203 = scmp.ne.s32.totalorder %s189, %s190
    %p204 = scmp.eq.s32.totalorder %s20, 1
    %p205 = por %p203, %p204
    %p207 = scmp.ne.s32.totalorder %s190, %s206
    %p208 = scmp.eq.s32.totalorder %s20, 0
    %p209 = por %p207, %p208
    %p210 = scmp.le.s32.totalorder 1, %s14
    %p211 = scmp.lt.s32.totalorder %s14, 3
    %p212 = pnand %p210, %p211
    %p213 = pneg %p212
    // Predicated region
    $region9: #{iconv2d_forward.1} parent=5 // pred_check
      _
    $region10: #{iconv2d_forward.1} parent=5 // pred_check_branch
      %215 = sbr.rel (%p212) target = $region12
    $region11: #{iconv2d_forward.1} parent=5 // pred_region
      %s216 = ssub.s32 %s14, 1
      // Predicated region
      $region13: #{iconv2d_forward.1} parent=11 // pred_check
        %p217 = pneg %p87
      $region14: #{iconv2d_forward.1} parent=11 // pred_check_branch
        %219 = sbr.rel (%p217) target = $region16
      $region15: #{iconv2d_forward.1} parent=11 // pred_region
        _
      $region16: #{iconv2d_forward.1} parent=11 // pred_fallthru
        _
      // Predicated region
      $region17: #{iconv2d_forward.1} parent=11 // pred_check
        %p220 = pneg %p108
      $region18: #{iconv2d_forward.1} parent=11 // pred_check_branch
        %222 = sbr.rel (%p220) target = $region20
      $region19: #{iconv2d_forward.1} parent=11 // pred_region
        _
      $region20: #{iconv2d_forward.1} parent=11 // pred_fallthru
        _
      // Predicated region
      $region21: #{iconv2d_forward.1} parent=11 // pred_check
        %p223 = pneg %p129
      $region22: #{iconv2d_forward.1} parent=11 // pred_check_branch
        %225 = sbr.rel (%p223) target = $region24
      $region23: #{iconv2d_forward.1} parent=11 // pred_region
        _
      $region24: #{iconv2d_forward.1} parent=11 // pred_fallthru
        _
      // Predicated region
      $region25: #{iconv2d_forward.1} parent=11 // pred_check
        %p226 = pneg %p150
      $region26: #{iconv2d_forward.1} parent=11 // pred_check_branch
        %228 = sbr.rel (%p226) target = $region28
      $region27: #{iconv2d_forward.1} parent=11 // pred_region
        _
      $region28: #{iconv2d_forward.1} parent=11 // pred_fallthru
        _
    $region12: #{iconv2d_forward.1} parent=5 // pred_fallthru
      _
    %p229 = scmp.lt.s32.totalorder %s14, 2
    // Predicated region
    $region29: #{iconv2d_forward.1} parent=5 // pred_check
      %p230 = pneg %p229
    $region30: #{iconv2d_forward.1} parent=5 // pred_check_branch
      %232 = sbr.rel (%p230) target = $region32
    $region31: #{iconv2d_forward.1} parent=5 // pred_region
      // Predicated region
      $region33: #{iconv2d_forward.1} parent=31 // pred_check
        %p233 = pneg %p34
      $region34: #{iconv2d_forward.1} parent=31 // pred_check_branch
        %235 = sbr.rel (%p233) target = $region36
      $region35: #{iconv2d_forward.1} parent=31 // pred_region
        %p236 = scmp.lt.s32.totalorder %s14, 1
        %s237 = scalar_select %p236, %s14, 1
        %s238 = smul.addr %s237, 2
        %s239 = smul.addr %s238, 4
        %s240 = scalar_lea.vmem %s0, %s239
      $region36: #{iconv2d_forward.1} parent=31 // pred_fallthru
        _
      // Predicated region
      $region37: #{iconv2d_forward.1} parent=31 // pred_check
        %p241 = pneg %p60
      $region38: #{iconv2d_forward.1} parent=31 // pred_check_branch
        %243 = sbr.rel (%p241) target = $region40
      $region39: #{iconv2d_forward.1} parent=31 // pred_region
        %p244 = scmp.lt.s32.totalorder %s14, 1
        %s245 = scalar_select %p244, %s14, 1
        %s246 = smul.addr %s245, 2
        %s247 = smul.addr %s246, 4
        %s248 = scalar_lea.vmem %s1, %s247
      $region40: #{iconv2d_forward.1} parent=31 // pred_fallthru
        _
    $region32: #{iconv2d_forward.1} parent=5 // pred_fallthru
      _
    %p249 = scmp.le.s32.totalorder 1, %s14
    %p250 = scmp.lt.s32.totalorder %s14, 3
    %p251 = pnand %p249, %p250
    %p252 = pneg %p251
    // Predicated region
    $region41: #{iconv2d_forward.1} parent=5 // pred_check
      _
    $region42: #{iconv2d_forward.1} parent=5 // pred_check_branch
      %254 = sbr.rel (%p251) target = $region44
    $region43: #{iconv2d_forward.1} parent=5 // pred_region
      %s255 = ssub.s32 %s14, 1
      %p256 = scmp.lt.s32.totalorder %s19, 1
      %s257 = scalar_select %p256, %s19, 1
      %s258 = smul.addr %s257, 2
      %s259 = smul.addr %s258, 4
      %s260 = scalar_lea.vmem %s0, %s259
      %p261 = pneg %p40
      %p262 = pneg %p37
      %p263 = scmp.lt.s32.totalorder %s19, 1
      %s264 = scalar_select %p263, %s19, 1
      %s265 = smul.addr %s264, 2
      %s266 = smul.addr %s265, 4
      %s267 = scalar_lea.vmem %s1, %s266
      %p268 = pneg %p66
      %p269 = pneg %p63
      %p270 = pneg %p87
      %p271 = pneg %p84
      %p272 = pneg %p108
      %p273 = pneg %p105
      %p274 = pneg %p129
      %p275 = pneg %p126
      %p276 = pneg %p150
      %p277 = pneg %p147
      %p278 = pneg %p176
      %p279 = pneg %p173
      %p280 = scmp.lt.s32.totalorder %s19, 1
      %s281 = scalar_select %p280, %s19, 1
      %s282 = smul.addr %s281, 2
      %s283 = smul.addr %s282, 8
      %s284 = scalar_lea.vmem %s6, %s283
      %p285 = pneg %p202
      %p286 = pneg %p199
      %p287 = scmp.lt.s32.totalorder %s19, 1
      %s288 = scalar_select %p287, %s19, 1
      %s289 = smul.addr %s288, 2
      %s290 = smul.addr %s289, 8
      %s291 = scalar_lea.vmem %s7, %s290
      %p292 = scmp.lt.s32.totalorder %s19, 1
      %s293 = scalar_select %p292, %s19, 1
      %s294 = smul.addr %s293, 2
      %s295 = smul.addr %s294, 4
      %s296 = scalar_lea.vmem %s0, %s295
      %p297 = scmp.lt.s32.totalorder %s19, 1
      %s298 = scalar_select %p297, %s19, 1
      %s299 = smul.addr %s298, 2
      %s300 = smul.addr %s299, 4
      %s301 = scalar_lea.vmem %s1, %s300
      %p302 = scmp.lt.s32.totalorder %s19, 1
      %s303 = scalar_select %p302, %s19, 1
      %s304 = smul.addr %s303, 2
      %s305 = smul.addr %s304, 8
      %s306 = scalar_lea.vmem %s6, %s305
      %p307 = scmp.lt.s32.totalorder %s19, 1
      %s308 = scalar_select %p307, %s19, 1
      %s309 = smul.addr %s308, 2
      %s310 = smul.addr %s309, 8
      %s311 = scalar_lea.vmem %s7, %s310
      %313 = vst [vmem:[#allocation2] sm:$0xf] 0
      %314 = vst [vmem:[#allocation2 + $0x4] sm:$0xf] 0
      %315 = vst [vmem:[#allocation2 + $0x8] sm:$0x1] 0
      %v316 = vld [vmem:[%s301] sm:$0xf]
      %v317 = vld [vmem:[%s301 + $0x4] sm:$0xf]
      %vm318 = vsmask.f32 256
      %vm319 = vsmask.f32 4368
      %vm320 = vmor %vm318, %vm319
      %v322 = vshrl.u32 %v316, 16
      %v324 = vrot.slane %v322, 7
      %v325 = vshll.u32 %v316, 16
      %v327 = vor.u32 %v324, %v325
      %v328 = vrot.slane %v324, 4
      %v330 = vshrl.u32 %v317, 16
      %v332 = vrot.slane %v330, 7
      %v333 = vshll.u32 %v317, 16
      %v335 = vor.u32 %v332, %v333
      %v336 = vsel %vm320, %v328, %v335
      %v337 = vrot.slane %v332, 4
      %vm341 = vcmask 1043456
      %vm342 = vsmask.f32 7938
      %vm343 = vmand %vm341, %vm342
      %v344 = vld [vmem:[#allocation2] sm:$0xf]
      %v345 = vsel %vm343, %v327, %v344
      %346 = vst [vmem:[#allocation2] sm:$0xf] %v345
      %347 = vst [vmem:[#allocation2 + $0x4] sm:$0xf] %v336
      %vm348 = vcmask 1040384
      %vm349 = vmand %vm348, %vm318
      %v350 = vld [vmem:[#allocation2 + $0x8] sm:$0x1]
      %v351 = vsel %vm349, %v337, %v350
      %352 = vst [vmem:[#allocation2 + $0x8] sm:$0x1] %v351
      %v353 = vld [vmem:[#allocation2] sm:$0xf]
      %v354 = vld [vmem:[#allocation2 + $0x4] sm:$0xf]
      %v355 = vld [vmem:[%s2] sm:$0xf]
      %v356 = vld [vmem:[%s2 + $0x4] sm:$0xf]
      %v357 = vld [vmem:[%s2 + $0x8] sm:$0xf]
      %v358 = vld [vmem:[%s2 + $0xc] sm:$0xf]
      %v359 = vld [vmem:[%s2 + $0x10] sm:$0xf]
      %v360 = vld [vmem:[%s2 + $0x14] sm:$0xf]
      %v361 = vld [vmem:[%s2 + $0x18] sm:$0xf]
      %v362 = vld [vmem:[%s2 + $0x1c] sm:$0xf]
      %v363 = vld [vmem:[%s2 + $0x20] sm:$0xf]
      %v364 = vld [vmem:[%s2 + $0x24] sm:$0xf]
      %v365 = vld [vmem:[%s2 + $0x28] sm:$0xf]
      %v366 = vld [vmem:[%s2 + $0x2c] sm:$0xf]
      %v367 = vld [vmem:[%s2 + $0x30] sm:$0xf]
      %v368 = vld [vmem:[%s2 + $0x34] sm:$0xf]
      %v369 = vld [vmem:[%s2 + $0x38] sm:$0xf]
      %v370 = vld [vmem:[%s2 + $0x3c] sm:$0xf]
      %v371 = vld [vmem:[#allocation2 + $0x8] sm:$0x1]
      %s372 = scalar_lea.vmem %s2, 64
      %v373 = vld [vmem:[%s372] sm:$0xf]
      %v374 = vld [vmem:[%s372 + $0x4] sm:$0xf]
      %v375 = vld [vmem:[%s372 + $0x8] sm:$0xf]
      %v376 = vld [vmem:[%s372 + $0xc] sm:$0xf]
      %v377 = vld [vmem:[%s372 + $0x10] sm:$0xf]
      %v378 = vld [vmem:[%s372 + $0x14] sm:$0xf]
      %v379 = vld [vmem:[%s372 + $0x18] sm:$0xf]
      %v380 = vld [vmem:[%s372 + $0x1c] sm:$0xf]
      %v381 = vld [vmem:[%s372 + $0x20] sm:$0xf]
      %v382 = vld [vmem:[%s372 + $0x24] sm:$0xf]
      %v383 = vld [vmem:[%s372 + $0x28] sm:$0xf]
      %v384 = vld [vmem:[%s372 + $0x2c] sm:$0xf]
      %v385 = vld [vmem:[%s372 + $0x30] sm:$0xf]
      %v386 = vld [vmem:[%s372 + $0x34] sm:$0xf]
      %v387 = vld [vmem:[%s372 + $0x38] sm:$0xf]
      %v388 = vld [vmem:[%s372 + $0x3c] sm:$0xf]
      %v392 = vunpack.c.l.b16 %v353
      %v393 = vunpack.c.l.b16 %v354
      %v394 = vunpack.c.l.b16 %v371
      %v395 = vpack.c.b16 %v393, %v392
      %v396 = vpack.c.b16 %v394, %v394
      %vm397 = vsmask.f32 7424
      %v399 = vshrl.u32 %v395, 16
      %v401 = vshll.u32 %v395, 16
      %v403 = vrot.slane %v401, 1
      %v404 = vor.u32 %v399, %v403
      %v406 = vshll.u32 %v396, 16
      %v408 = vrot.slane %v406, 1
      %v409 = vsel %vm397, %v404, %v408
      %v427 = vunpack.c.l.b16 %v373
      %v428 = vunpack.c.l.b16 %v374
      %v429 = vunpack.c.l.b16 %v375
      %v430 = vunpack.c.l.b16 %v376
      %v431 = vunpack.c.l.b16 %v377
      %v432 = vunpack.c.l.b16 %v378
      %v433 = vunpack.c.l.b16 %v379
      %v434 = vunpack.c.l.b16 %v380
      %v435 = vunpack.c.l.b16 %v381
      %v436 = vunpack.c.l.b16 %v382
      %v437 = vunpack.c.l.b16 %v383
      %v438 = vunpack.c.l.b16 %v384
      %v439 = vunpack.c.l.b16 %v385
      %v440 = vunpack.c.l.b16 %v386
      %v441 = vunpack.c.l.b16 %v387
      %v442 = vunpack.c.l.b16 %v388
      %v443 = vpack.c.b16 %v428, %v427
      %v444 = vpack.c.b16 %v430, %v429
      %v445 = vpack.c.b16 %v432, %v431
      %v446 = vpack.c.b16 %v434, %v433
      %v447 = vpack.c.b16 %v436, %v435
      %v448 = vpack.c.b16 %v438, %v437
      %v449 = vpack.c.b16 %v440, %v439
      %v450 = vpack.c.b16 %v442, %v441
      %459 = vmatprep.subr.bf16.mxu0 0
      %460 = vmatpush1.bf16.msra.mxu0 %v443
      %461 = vmatprep.subr.bf16.mxu0 0
      %462 = vmatpush1.bf16.msra.mxu0 %v444
      %463 = vmatprep.subr.bf16.mxu0 0
      %464 = vmatpush1.bf16.msra.mxu0 %v445
      %465 = vmatprep.subr.bf16.mxu0 0
      %466 = vmatpush1.bf16.msra.mxu0 %v446
      %467 = vmatprep.subr.bf16.mxu0 0
      %468 = vmatpush1.bf16.msra.mxu0 %v447
      %469 = vmatprep.subr.bf16.mxu0 0
      %470 = vmatpush1.bf16.msra.mxu0 %v448
      %471 = vmatprep.subr.bf16.mxu0 0
      %472 = vmatpush1.bf16.msra.mxu0 %v449
      %473 = vmatprep.subr.bf16.mxu0 0
      %474 = vmatpush1.bf16.msra.mxu0 %v450
      %475 = vmatprep.subr.bf16.mxu0 0
      %476 = vmatpush1.bf16.msra.mxu0 0
      %477 = vmatprep.subr.bf16.mxu0 0
      %478 = vmatpush1.bf16.msra.mxu0 0
      %479 = vmatprep.subr.bf16.mxu0 0
      %480 = vmatpush1.bf16.msra.mxu0 0
      %481 = vmatprep.subr.bf16.mxu0 0
      %482 = vmatpush1.bf16.msra.mxu0 0
      %483 = vmatprep.subr.bf16.mxu0 0
      %484 = vmatpush1.bf16.msra.mxu0 0
      %485 = vmatprep.subr.bf16.mxu0 0
      %486 = vmatpush1.bf16.msra.mxu0 0
      %487 = vmatprep.subr.bf16.mxu0 0
      %488 = vmatpush1.bf16.msra.mxu0 0
      %489 = vmatprep.subr.bf16.mxu0 0
      %490 = vmatpush1.bf16.msra.mxu0 0
      %491 = vmatprep.mubr.bf16.mxu0 0
      %492 = vmatmul.mubr.bf16.gmra.mrb[0].mxu0 %v409
      %v493 = vpop.f32.mrb[0].mxu0
      %v494 = vadd.f32 0.0, %v493
      %v495 = vpop.f32.mrb[0].mxu0
      %v496 = vpop.f32.mrb[0].mxu0
      %v497 = vadd.f32 0.0, %v496
      %v498 = vpop.f32.mrb[0].mxu0
      %499 = vdwg.mxu0
      %v517 = vunpack.c.l.b16 %v355
      %v518 = vunpack.c.l.b16 %v356
      %v519 = vunpack.c.l.b16 %v357
      %v520 = vunpack.c.l.b16 %v358
      %v521 = vunpack.c.l.b16 %v359
      %v522 = vunpack.c.l.b16 %v360
      %v523 = vunpack.c.l.b16 %v361
      %v524 = vunpack.c.l.b16 %v362
      %v525 = vunpack.c.l.b16 %v363
      %v526 = vunpack.c.l.b16 %v364
      %v527 = vunpack.c.l.b16 %v365
      %v528 = vunpack.c.l.b16 %v366
      %v529 = vunpack.c.l.b16 %v367
      %v530 = vunpack.c.l.b16 %v368
      %v531 = vunpack.c.l.b16 %v369
      %v532 = vunpack.c.l.b16 %v370
      %v533 = vpack.c.b16 %v518, %v517
      %v534 = vpack.c.b16 %v520, %v519
      %v535 = vpack.c.b16 %v522, %v521
      %v536 = vpack.c.b16 %v524, %v523
      %v537 = vpack.c.b16 %v526, %v525
      %v538 = vpack.c.b16 %v528, %v527
      %v539 = vpack.c.b16 %v530, %v529
      %v540 = vpack.c.b16 %v532, %v531
      %549 = vmatprep.subr.bf16.mxu0 0
      %550 = vmatpush1.bf16.msra.mxu0 %v533
      %551 = vmatprep.subr.bf16.mxu0 0
      %552 = vmatpush1.bf16.msra.mxu0 %v534
      %553 = vmatprep.subr.bf16.mxu0 0
      %554 = vmatpush1.bf16.msra.mxu0 %v535
      %555 = vmatprep.subr.bf16.mxu0 0
      %556 = vmatpush1.bf16.msra.mxu0 %v536
      %557 = vmatprep.subr.bf16.mxu0 0
      %558 = vmatpush1.bf16.msra.mxu0 %v537
      %559 = vmatprep.subr.bf16.mxu0 0
      %560 = vmatpush1.bf16.msra.mxu0 %v538
      %561 = vmatprep.subr.bf16.mxu0 0
      %562 = vmatpush1.bf16.msra.mxu0 %v539
      %563 = vmatprep.subr.bf16.mxu0 0
      %564 = vmatpush1.bf16.msra.mxu0 %v540
      %565 = vmatprep.subr.bf16.mxu0 0
      %566 = vmatpush1.bf16.msra.mxu0 0
      %567 = vmatprep.subr.bf16.mxu0 0
      %568 = vmatpush1.bf16.msra.mxu0 0
      %569 = vmatprep.subr.bf16.mxu0 0
      %570 = vmatpush1.bf16.msra.mxu0 0
      %571 = vmatprep.subr.bf16.mxu0 0
      %572 = vmatpush1.bf16.msra.mxu0 0
      %573 = vmatprep.subr.bf16.mxu0 0
      %574 = vmatpush1.bf16.msra.mxu0 0
      %575 = vmatprep.subr.bf16.mxu0 0
      %576 = vmatpush1.bf16.msra.mxu0 0
      %577 = vmatprep.subr.bf16.mxu0 0
      %578 = vmatpush1.bf16.msra.mxu0 0
      %579 = vmatprep.subr.bf16.mxu0 0
      %580 = vmatpush1.bf16.msra.mxu0 0
      %581 = vmatprep.mubr.bf16.mxu0 0
      %582 = vmatmul.mubr.bf16.gmra.mrb[0].mxu0 %v395
      %v583 = vpop.f32.mrb[0].mxu0
      %v584 = vadd.f32 %v494, %v583
      %v585 = vpop.f32.mrb[0].mxu0
      %v586 = vpop.f32.mrb[0].mxu0
      %v587 = vadd.f32 %v497, %v586
      %v588 = vpop.f32.mrb[0].mxu0
      %589 = vdwg.mxu0
      %v590 = vld [vmem:[#allocation2] sm:$0xe]
      %s591 = scalar_lea.vmem %s2, 128
      %v592 = vld [vmem:[%s591] sm:$0xf]
      %v593 = vld [vmem:[%s591 + $0x4] sm:$0xf]
      %v594 = vld [vmem:[%s591 + $0x8] sm:$0xf]
      %v595 = vld [vmem:[%s591 + $0xc] sm:$0xf]
      %v596 = vld [vmem:[%s591 + $0x10] sm:$0xf]
      %v597 = vld [vmem:[%s591 + $0x14] sm:$0xf]
      %v598 = vld [vmem:[%s591 + $0x18] sm:$0xf]
      %v599 = vld [vmem:[%s591 + $0x1c] sm:$0xf]
      %v600 = vld [vmem:[%s591 + $0x20] sm:$0xf]
      %v601 = vld [vmem:[%s591 + $0x24] sm:$0xf]
      %v602 = vld [vmem:[%s591 + $0x28] sm:$0xf]
      %v603 = vld [vmem:[%s591 + $0x2c] sm:$0xf]
      %v604 = vld [vmem:[%s591 + $0x30] sm:$0xf]
      %v605 = vld [vmem:[%s591 + $0x34] sm:$0xf]
      %v606 = vld [vmem:[%s591 + $0x38] sm:$0xf]
      %v607 = vld [vmem:[%s591 + $0x3c] sm:$0xf]
      %v609 = vunpack.c.l.b16 %v590
      %v610 = vpack.c.b16 %v393, %v609
      %vm611 = vcmask 1046528
      %v612 = vrot.slane %v610, 1
      %v613 = vrot.slane %v396, 1
      %v614 = vsel %vm611, %v612, %v613
      %v632 = vunpack.c.l.b16 %v592
      %v633 = vunpack.c.l.b16 %v593
      %v634 = vunpack.c.l.b16 %v594
      %v635 = vunpack.c.l.b16 %v595
      %v636 = vunpack.c.l.b16 %v596
      %v637 = vunpack.c.l.b16 %v597
      %v638 = vunpack.c.l.b16 %v598
      %v639 = vunpack.c.l.b16 %v599
      %v640 = vunpack.c.l.b16 %v600
      %v641 = vunpack.c.l.b16 %v601
      %v642 = vunpack.c.l.b16 %v602
      %v643 = vunpack.c.l.b16 %v603
      %v644 = vunpack.c.l.b16 %v604
      %v645 = vunpack.c.l.b16 %v605
      %v646 = vunpack.c.l.b16 %v606
      %v647 = vunpack.c.l.b16 %v607
      %v648 = vpack.c.b16 %v633, %v632
      %v649 = vpack.c.b16 %v635, %v634
      %v650 = vpack.c.b16 %v637, %v636
      %v651 = vpack.c.b16 %v639, %v638
      %v652 = vpack.c.b16 %v641, %v640
      %v653 = vpack.c.b16 %v643, %v642
      %v654 = vpack.c.b16 %v645, %v644
      %v655 = vpack.c.b16 %v647, %v646
      %664 = vmatprep.subr.bf16.mxu0 0
      %665 = vmatpush1.bf16.msra.mxu0 %v648
      %666 = vmatprep.subr.bf16.mxu0 0
      %667 = vmatpush1.bf16.msra.mxu0 %v649
      %668 = vmatprep.subr.bf16.mxu0 0
      %669 = vmatpush1.bf16.msra.mxu0 %v650
      %670 = vmatprep.subr.bf16.mxu0 0
      %671 = vmatpush1.bf16.msra.mxu0 %v651
      %672 = vmatprep.subr.bf16.mxu0 0
      %673 = vmatpush1.bf16.msra.mxu0 %v652
      %674 = vmatprep.subr.bf16.mxu0 0
      %675 = vmatpush1.bf16.msra.mxu0 %v653
      %676 = vmatprep.subr.bf16.mxu0 0
      %677 = vmatpush1.bf16.msra.mxu0 %v654
      %678 = vmatprep.subr.bf16.mxu0 0
      %679 = vmatpush1.bf16.msra.mxu0 %v655
      %680 = vmatprep.subr.bf16.mxu0 0
      %681 = vmatpush1.bf16.msra.mxu0 0
      %682 = vmatprep.subr.bf16.mxu0 0
      %683 = vmatpush1.bf16.msra.mxu0 0
      %684 = vmatprep.subr.bf16.mxu0 0
      %685 = vmatpush1.bf16.msra.mxu0 0
      %686 = vmatprep.subr.bf16.mxu0 0
      %687 = vmatpush1.bf16.msra.mxu0 0
      %688 = vmatprep.subr.bf16.mxu0 0
      %689 = vmatpush1.bf16.msra.mxu0 0
      %690 = vmatprep.subr.bf16.mxu0 0
      %691 = vmatpush1.bf16.msra.mxu0 0
      %692 = vmatprep.subr.bf16.mxu0 0
      %693 = vmatpush1.bf16.msra.mxu0 0
      %694 = vmatprep.subr.bf16.mxu0 0
      %695 = vmatpush1.bf16.msra.mxu0 0
      %696 = vmatprep.mubr.bf16.mxu0 0
      %697 = vmatmul.mubr.bf16.gmra.mrb[0].mxu0 %v614
      %v698 = vpop.f32.mrb[0].mxu0
      %v699 = vadd.f32 0.0, %v698
      %v700 = vpop.f32.mrb[0].mxu0
      %v701 = vpop.f32.mrb[0].mxu0
      %v702 = vadd.f32 0.0, %v701
      %v703 = vpop.f32.mrb[0].mxu0
      %704 = vdwg.mxu0
      %v705 = vadd.f32 %v584, %v699
      %v706 = vadd.f32 %v587, %v702
      %v707 = vld [vmem:[%s296] sm:$0xf]
      %v708 = vld [vmem:[%s296 + $0x4] sm:$0xf]
      %v709 = vunpack.c.l.bf16 %v707
      %v710 = vunpack.c.l.bf16 %v708
      %v711 = vadd.f32 %v709, %v705
      %v712 = vadd.f32 %v710, %v706
      %v713 = vld [vmem:[%s3] sm:$0x1]
      %v715 = vlaneseq
      %v716 = vshrl.u32 %v715, 7
      %v717 = vsub.s32 0, %v716
      %v718 = vrot.slane %v713, %v717
      %v720 = vadd.f32 %v711, %v718
      %v721 = vadd.f32 %v712, %v718
      %722 = vst [vmem:[%s306] sm:$0xff] %v720
      %723 = vst [vmem:[%s306 + $0x8] sm:$0xff] %v721
      %v724 = vpack.c.bf16 %v721, %v720
      %v726 = vunpack.c.l.b16 %v724
      %v727 = vunpack.c.h.b16 %v724
      %v728 = vpack.c.b16 %v726, %v726
      %v729 = vpack.c.b16 %v727, %v727
      %v731 = vshrl.u32 %v728, 16
      %v733 = vrot.slane %v731, 7
      %v734 = vshll.u32 %v728, 16
      %v736 = vor.u32 %v733, %v734
      %v737 = vrot.slane %v733, 4
      %v739 = vshrl.u32 %v729, 16
      %v741 = vrot.slane %v739, 7
      %v742 = vshll.u32 %v729, 16
      %v744 = vor.u32 %v741, %v742
      %v745 = vsel %vm320, %v737, %v744
      %v746 = vrot.slane %v741, 4
      %v750 = vld [vmem:[#allocation2] sm:$0xf]
      %v751 = vsel %vm343, %v736, %v750
      %752 = vst [vmem:[#allocation2] sm:$0xf] %v751
      %753 = vst [vmem:[#allocation2 + $0x4] sm:$0xf] %v745
      %v754 = vld [vmem:[#allocation2 + $0x8] sm:$0x1]
      %v755 = vsel %vm349, %v746, %v754
      %756 = vst [vmem:[#allocation2 + $0x8] sm:$0x1] %v755
      %v757 = vld [vmem:[#allocation2] sm:$0xf]
      %v758 = vld [vmem:[#allocation2 + $0x4] sm:$0xf]
      %v759 = vld [vmem:[%s4] sm:$0xf]
      %v760 = vld [vmem:[%s4 + $0x4] sm:$0xf]
      %v761 = vld [vmem:[%s4 + $0x8] sm:$0xf]
      %v762 = vld [vmem:[%s4 + $0xc] sm:$0xf]
      %v763 = vld [vmem:[%s4 + $0x10] sm:$0xf]
      %v764 = vld [vmem:[%s4 + $0x14] sm:$0xf]
      %v765 = vld [vmem:[%s4 + $0x18] sm:$0xf]
      %v766 = vld [vmem:[%s4 + $0x1c] sm:$0xf]
      %v767 = vld [vmem:[%s4 + $0x20] sm:$0xf]
      %v768 = vld [vmem:[%s4 + $0x24] sm:$0xf]
      %v769 = vld [vmem:[%s4 + $0x28] sm:$0xf]
      %v770 = vld [vmem:[%s4 + $0x2c] sm:$0xf]
      %v771 = vld [vmem:[%s4 + $0x30] sm:$0xf]
      %v772 = vld [vmem:[%s4 + $0x34] sm:$0xf]
      %v773 = vld [vmem:[%s4 + $0x38] sm:$0xf]
      %v774 = vld [vmem:[%s4 + $0x3c] sm:$0xf]
      %v775 = vld [vmem:[#allocation2 + $0x8] sm:$0x1]
      %s776 = scalar_lea.vmem %s4, 64
      %v777 = vld [vmem:[%s776] sm:$0xf]
      %v778 = vld [vmem:[%s776 + $0x4] sm:$0xf]
      %v779 = vld [vmem:[%s776 + $0x8] sm:$0xf]
      %v780 = vld [vmem:[%s776 + $0xc] sm:$0xf]
      %v781 = vld [vmem:[%s776 + $0x10] sm:$0xf]
      %v782 = vld [vmem:[%s776 + $0x14] sm:$0xf]
      %v783 = vld [vmem:[%s776 + $0x18] sm:$0xf]
      %v784 = vld [vmem:[%s776 + $0x1c] sm:$0xf]
      %v785 = vld [vmem:[%s776 + $0x20] sm:$0xf]
      %v786 = vld [vmem:[%s776 + $0x24] sm:$0xf]
      %v787 = vld [vmem:[%s776 + $0x28] sm:$0xf]
      %v788 = vld [vmem:[%s776 + $0x2c] sm:$0xf]
      %v789 = vld [vmem:[%s776 + $0x30] sm:$0xf]
      %v790 = vld [vmem:[%s776 + $0x34] sm:$0xf]
      %v791 = vld [vmem:[%s776 + $0x38] sm:$0xf]
      %v792 = vld [vmem:[%s776 + $0x3c] sm:$0xf]
      %v796 = vunpack.c.l.b16 %v757
      %v797 = vunpack.c.l.b16 %v758
      %v798 = vunpack.c.l.b16 %v775
      %v799 = vpack.c.b16 %v797, %v796
      %v800 = vpack.c.b16 %v798, %v798
      %v802 = vshrl.u32 %v799, 16
      %v804 = vshll.u32 %v799, 16
      %v806 = vrot.slane %v804, 1
      %v807 = vor.u32 %v802, %v806
      %v809 = vshll.u32 %v800, 16
      %v811 = vrot.slane %v809, 1
      %v812 = vsel %vm397, %v807, %v811
      %v830 = vunpack.c.l.b16 %v777
      %v831 = vunpack.c.l.b16 %v778
      %v832 = vunpack.c.l.b16 %v779
      %v833 = vunpack.c.l.b16 %v780
      %v834 = vunpack.c.l.b16 %v781
      %v835 = vunpack.c.l.b16 %v782
      %v836 = vunpack.c.l.b16 %v783
      %v837 = vunpack.c.l.b16 %v784
      %v838 = vunpack.c.l.b16 %v785
      %v839 = vunpack.c.l.b16 %v786
      %v840 = vunpack.c.l.b16 %v787
      %v841 = vunpack.c.l.b16 %v788
      %v842 = vunpack.c.l.b16 %v789
      %v843 = vunpack.c.l.b16 %v790
      %v844 = vunpack.c.l.b16 %v791
      %v845 = vunpack.c.l.b16 %v792
      %v846 = vpack.c.b16 %v831, %v830
      %v847 = vpack.c.b16 %v833, %v832
      %v848 = vpack.c.b16 %v835, %v834
      %v849 = vpack.c.b16 %v837, %v836
      %v850 = vpack.c.b16 %v839, %v838
      %v851 = vpack.c.b16 %v841, %v840
      %v852 = vpack.c.b16 %v843, %v842
      %v853 = vpack.c.b16 %v845, %v844
      %862 = vmatprep.subr.bf16.mxu0 0
      %863 = vmatpush1.bf16.msra.mxu0 %v846
      %864 = vmatprep.subr.bf16.mxu0 0
      %865 = vmatpush1.bf16.msra.mxu0 %v847
      %866 = vmatprep.subr.bf16.mxu0 0
      %867 = vmatpush1.bf16.msra.mxu0 %v848
      %868 = vmatprep.subr.bf16.mxu0 0
      %869 = vmatpush1.bf16.msra.mxu0 %v849
      %870 = vmatprep.subr.bf16.mxu0 0
      %871 = vmatpush1.bf16.msra.mxu0 %v850
      %872 = vmatprep.subr.bf16.mxu0 0
      %873 = vmatpush1.bf16.msra.mxu0 %v851
      %874 = vmatprep.subr.bf16.mxu0 0
      %875 = vmatpush1.bf16.msra.mxu0 %v852
      %876 = vmatprep.subr.bf16.mxu0 0
      %877 = vmatpush1.bf16.msra.mxu0 %v853
      %878 = vmatprep.subr.bf16.mxu0 0
      %879 = vmatpush1.bf16.msra.mxu0 0
      %880 = vmatprep.subr.bf16.mxu0 0
      %881 = vmatpush1.bf16.msra.mxu0 0
      %882 = vmatprep.subr.bf16.mxu0 0
      %883 = vmatpush1.bf16.msra.mxu0 0
      %884 = vmatprep.subr.bf16.mxu0 0
      %885 = vmatpush1.bf16.msra.mxu0 0
      %886 = vmatprep.subr.bf16.mxu0 0
      %887 = vmatpush1.bf16.msra.mxu0 0
      %888 = vmatprep.subr.bf16.mxu0 0
      %889 = vmatpush1.bf16.msra.mxu0 0
      %890 = vmatprep.subr.bf16.mxu0 0
      %891 = vmatpush1.bf16.msra.mxu0 0
      %892 = vmatprep.subr.bf16.mxu0 0
      %893 = vmatpush1.bf16.msra.mxu0 0
      %894 = vmatprep.mubr.bf16.mxu0 0
      %895 = vmatmul.mubr.bf16.gmra.mrb[0].mxu0 %v812
      %v896 = vpop.f32.mrb[0].mxu0
      %v897 = vadd.f32 0.0, %v896
      %v898 = vpop.f32.mrb[0].mxu0
      %v899 = vpop.f32.mrb[0].mxu0
      %v900 = vadd.f32 0.0, %v899
      %v901 = vpop.f32.mrb[0].mxu0
      %902 = vdwg.mxu0
      %v920 = vunpack.c.l.b16 %v759
      %v921 = vunpack.c.l.b16 %v760
      %v922 = vunpack.c.l.b16 %v761
      %v923 = vunpack.c.l.b16 %v762
      %v924 = vunpack.c.l.b16 %v763
      %v925 = vunpack.c.l.b16 %v764
      %v926 = vunpack.c.l.b16 %v765
      %v927 = vunpack.c.l.b16 %v766
      %v928 = vunpack.c.l.b16 %v767
      %v929 = vunpack.c.l.b16 %v768
      %v930 = vunpack.c.l.b16 %v769
      %v931 = vunpack.c.l.b16 %v770
      %v932 = vunpack.c.l.b16 %v771
      %v933 = vunpack.c.l.b16 %v772
      %v934 = vunpack.c.l.b16 %v773
      %v935 = vunpack.c.l.b16 %v774
      %v936 = vpack.c.b16 %v921, %v920
      %v937 = vpack.c.b16 %v923, %v922
      %v938 = vpack.c.b16 %v925, %v924
      %v939 = vpack.c.b16 %v927, %v926
      %v940 = vpack.c.b16 %v929, %v928
      %v941 = vpack.c.b16 %v931, %v930
      %v942 = vpack.c.b16 %v933, %v932
      %v943 = vpack.c.b16 %v935, %v934
      %952 = vmatprep.subr.bf16.mxu0 0
      %953 = vmatpush1.bf16.msra.mxu0 %v936
      %954 = vmatprep.subr.bf16.mxu0 0
      %955 = vmatpush1.bf16.msra.mxu0 %v937
      %956 = vmatprep.subr.bf16.mxu0 0
      %957 = vmatpush1.bf16.msra.mxu0 %v938
      %958 = vmatprep.subr.bf16.mxu0 0
      %959 = vmatpush1.bf16.msra.mxu0 %v939
      %960 = vmatprep.subr.bf16.mxu0 0
      %961 = vmatpush1.bf16.msra.mxu0 %v940
      %962 = vmatprep.subr.bf16.mxu0 0
      %963 = vmatpush1.bf16.msra.mxu0 %v941
      %964 = vmatprep.subr.bf16.mxu0 0
      %965 = vmatpush1.bf16.msra.mxu0 %v942
      %966 = vmatprep.subr.bf16.mxu0 0
      %967 = vmatpush1.bf16.msra.mxu0 %v943
      %968 = vmatprep.subr.bf16.mxu0 0
      %969 = vmatpush1.bf16.msra.mxu0 0
      %970 = vmatprep.subr.bf16.mxu0 0
      %971 = vmatpush1.bf16.msra.mxu0 0
      %972 = vmatprep.subr.bf16.mxu0 0
      %973 = vmatpush1.bf16.msra.mxu0 0
      %974 = vmatprep.subr.bf16.mxu0 0
      %975 = vmatpush1.bf16.msra.mxu0 0
      %976 = vmatprep.subr.bf16.mxu0 0
      %977 = vmatpush1.bf16.msra.mxu0 0
      %978 = vmatprep.subr.bf16.mxu0 0
      %979 = vmatpush1.bf16.msra.mxu0 0
      %980 = vmatprep.subr.bf16.mxu0 0
      %981 = vmatpush1.bf16.msra.mxu0 0
      %982 = vmatprep.subr.bf16.mxu0 0
      %983 = vmatpush1.bf16.msra.mxu0 0
      %984 = vmatprep.mubr.bf16.mxu0 0
      %985 = vmatmul.mubr.bf16.gmra.mrb[0].mxu0 %v799
      %v986 = vpop.f32.mrb[0].mxu0
      %v987 = vadd.f32 %v897, %v986
      %v988 = vpop.f32.mrb[0].mxu0
      %v989 = vpop.f32.mrb[0].mxu0
      %v990 = vadd.f32 %v900, %v989
      %v991 = vpop.f32.mrb[0].mxu0
      %992 = vdwg.mxu0
      %v993 = vld [vmem:[#allocation2] sm:$0xe]
      %s994 = scalar_lea.vmem %s4, 128
      %v995 = vld [vmem:[%s994] sm:$0xf]
      %v996 = vld [vmem:[%s994 + $0x4] sm:$0xf]
      %v997 = vld [vmem:[%s994 + $0x8] sm:$0xf]
      %v998 = vld [vmem:[%s994 + $0xc] sm:$0xf]
      %v999 = vld [vmem:[%s994 + $0x10] sm:$0xf]
      %v1000 = vld [vmem:[%s994 + $0x14] sm:$0xf]
      %v1001 = vld [vmem:[%s994 + $0x18] sm:$0xf]
      %v1002 = vld [vmem:[%s994 + $0x1c] sm:$0xf]
      %v1003 = vld [vmem:[%s994 + $0x20] sm:$0xf]
      %v1004 = vld [vmem:[%s994 + $0x24] sm:$0xf]
      %v1005 = vld [vmem:[%s994 + $0x28] sm:$0xf]
      %v1006 = vld [vmem:[%s994 + $0x2c] sm:$0xf]
      %v1007 = vld [vmem:[%s994 + $0x30] sm:$0xf]
      %v1008 = vld [vmem:[%s994 + $0x34] sm:$0xf]
      %v1009 = vld [vmem:[%s994 + $0x38] sm:$0xf]
      %v1010 = vld [vmem:[%s994 + $0x3c] sm:$0xf]
      %v1012 = vunpack.c.l.b16 %v993
      %v1013 = vpack.c.b16 %v797, %v1012
      %v1014 = vrot.slane %v1013, 1
      %v1015 = vrot.slane %v800, 1
      %v1016 = vsel %vm611, %v1014, %v1015
      %v1034 = vunpack.c.l.b16 %v995
      %v1035 = vunpack.c.l.b16 %v996
      %v1036 = vunpack.c.l.b16 %v997
      %v1037 = vunpack.c.l.b16 %v998
      %v1038 = vunpack.c.l.b16 %v999
      %v1039 = vunpack.c.l.b16 %v1000
      %v1040 = vunpack.c.l.b16 %v1001
      %v1041 = vunpack.c.l.b16 %v1002
      %v1042 = vunpack.c.l.b16 %v1003
      %v1043 = vunpack.c.l.b16 %v1004
      %v1044 = vunpack.c.l.b16 %v1005
      %v1045 = vunpack.c.l.b16 %v1006
      %v1046 = vunpack.c.l.b16 %v1007
      %v1047 = vunpack.c.l.b16 %v1008
      %v1048 = vunpack.c.l.b16 %v1009
      %v1049 = vunpack.c.l.b16 %v1010
      %v1050 = vpack.c.b16 %v1035, %v1034
      %v1051 = vpack.c.b16 %v1037, %v1036
      %v1052 = vpack.c.b16 %v1039, %v1038
      %v1053 = vpack.c.b16 %v1041, %v1040
      %v1054 = vpack.c.b16 %v1043, %v1042
      %v1055 = vpack.c.b16 %v1045, %v1044
      %v1056 = vpack.c.b16 %v1047, %v1046
      %v1057 = vpack.c.b16 %v1049, %v1048
      %1066 = vmatprep.subr.bf16.mxu0 0
      %1067 = vmatpush1.bf16.msra.mxu0 %v1050
      %1068 = vmatprep.subr.bf16.mxu0 0
      %1069 = vmatpush1.bf16.msra.mxu0 %v1051
      %1070 = vmatprep.subr.bf16.mxu0 0
      %1071 = vmatpush1.bf16.msra.mxu0 %v1052
      %1072 = vmatprep.subr.bf16.mxu0 0
      %1073 = vmatpush1.bf16.msra.mxu0 %v1053
      %1074 = vmatprep.subr.bf16.mxu0 0
      %1075 = vmatpush1.bf16.msra.mxu0 %v1054
      %1076 = vmatprep.subr.bf16.mxu0 0
      %1077 = vmatpush1.bf16.msra.mxu0 %v1055
      %1078 = vmatprep.subr.bf16.mxu0 0
      %1079 = vmatpush1.bf16.msra.mxu0 %v1056
      %1080 = vmatprep.subr.bf16.mxu0 0
      %1081 = vmatpush1.bf16.msra.mxu0 %v1057
      %1082 = vmatprep.subr.bf16.mxu0 0
      %1083 = vmatpush1.bf16.msra.mxu0 0
      %1084 = vmatprep.subr.bf16.mxu0 0
      %1085 = vmatpush1.bf16.msra.mxu0 0
      %1086 = vmatprep.subr.bf16.mxu0 0
      %1087 = vmatpush1.bf16.msra.mxu0 0
      %1088 = vmatprep.subr.bf16.mxu0 0
      %1089 = vmatpush1.bf16.msra.mxu0 0
      %1090 = vmatprep.subr.bf16.mxu0 0
      %1091 = vmatpush1.bf16.msra.mxu0 0
      %1092 = vmatprep.subr.bf16.mxu0 0
      %1093 = vmatpush1.bf16.msra.mxu0 0
      %1094 = vmatprep.subr.bf16.mxu0 0
      %1095 = vmatpush1.bf16.msra.mxu0 0
      %1096 = vmatprep.subr.bf16.mxu0 0
      %1097 = vmatpush1.bf16.msra.mxu0 0
      %1098 = vmatprep.mubr.bf16.mxu0 0
      %1099 = vmatmul.mubr.bf16.gmra.mrb[0].mxu0 %v1016
      %v1100 = vpop.f32.mrb[0].mxu0
      %v1101 = vadd.f32 0.0, %v1100
      %v1102 = vpop.f32.mrb[0].mxu0
      %v1103 = vpop.f32.mrb[0].mxu0
      %v1104 = vadd.f32 0.0, %v1103
      %v1105 = vpop.f32.mrb[0].mxu0
      %1106 = vdwg.mxu0
      %v1107 = vadd.f32 %v987, %v1101
      %v1108 = vadd.f32 %v990, %v1104
      %v1109 = vld [vmem:[%s301] sm:$0xf]
      %v1110 = vld [vmem:[%s301 + $0x4] sm:$0xf]
      %v1111 = vunpack.c.l.bf16 %v1109
      %v1112 = vunpack.c.l.bf16 %v1110
      %v1113 = vadd.f32 %v1111, %v1107
      %v1114 = vadd.f32 %v1112, %v1108
      %v1115 = vld [vmem:[%s5] sm:$0x1]
      %v1117 = vlaneseq
      %v1118 = vshrl.u32 %v1117, 7
      %v1119 = vsub.s32 0, %v1118
      %v1120 = vrot.slane %v1115, %v1119
      %v1122 = vadd.f32 %v1113, %v1120
      %v1123 = vadd.f32 %v1114, %v1120
      %1124 = vst [vmem:[%s311] sm:$0xff] %v1122
      %1125 = vst [vmem:[%s311 + $0x8] sm:$0xff] %v1123
      %p1126 = scmp.lt.s32.totalorder %s19, 1
      %s1127 = scalar_select %p1126, %s19, 1
      %s1128 = smul.addr %s1127, 2
      %s1129 = smul.addr %s1128, 8
      %s1130 = scalar_lea.vmem %s6, %s1129
      %p1131 = scmp.lt.s32.totalorder %s19, 1
      %s1132 = scalar_select %p1131, %s19, 1
      %s1133 = smul.addr %s1132, 2
      %s1134 = smul.addr %s1133, 8
      %s1135 = scalar_lea.vmem %s7, %s1134
      // Predicated region
      $region45: #{iconv2d_forward.1} parent=43 // pred_check
        %p1136 = pneg %p173
      $region46: #{iconv2d_forward.1} parent=43 // pred_check_branch
        %1138 = sbr.rel (%p1136) target = $region48
      $region47: #{iconv2d_forward.1} parent=43 // pred_region
        _
      $region48: #{iconv2d_forward.1} parent=43 // pred_fallthru
        _
      // Predicated region
      $region49: #{iconv2d_forward.1} parent=43 // pred_check
        %p1139 = pneg %p199
      $region50: #{iconv2d_forward.1} parent=43 // pred_check_branch
        %1141 = sbr.rel (%p1139) target = $region52
      $region51: #{iconv2d_forward.1} parent=43 // pred_region
        _
      $region52: #{iconv2d_forward.1} parent=43 // pred_fallthru
        _
    $region44: #{iconv2d_forward.1} parent=5 // pred_fallthru
      _
    %p1142 = scmp.le.s32.totalorder 2, %s14
    // Predicated region
    $region53: #{iconv2d_forward.1} parent=5 // pred_check
      %p1143 = pneg %p1142
    $region54: #{iconv2d_forward.1} parent=5 // pred_check_branch
      %1145 = sbr.rel (%p1143) target = $region56
    $region55: #{iconv2d_forward.1} parent=5 // pred_region
      %s1146 = ssub.s32 %s14, 2
      // Predicated region
      $region57: #{iconv2d_forward.1} parent=55 // pred_check
        %p1147 = pneg %p179
      $region58: #{iconv2d_forward.1} parent=55 // pred_check_branch
        %1149 = sbr.rel (%p1147) target = $region60
      $region59: #{iconv2d_forward.1} parent=55 // pred_region
        %p1150 = scmp.lt.s32.totalorder %s20, 1
        %s1151 = scalar_select %p1150, %s20, 1
        %s1152 = smul.addr %s1151, 2
        %s1153 = smul.addr %s1152, 8
        %s1154 = scalar_lea.vmem %s6, %s1153
      $region60: #{iconv2d_forward.1} parent=55 // pred_fallthru
        _
      // Predicated region
      $region61: #{iconv2d_forward.1} parent=55 // pred_check
        %p1155 = pneg %p205
      $region62: #{iconv2d_forward.1} parent=55 // pred_check_branch
        %1157 = sbr.rel (%p1155) target = $region64
      $region63: #{iconv2d_forward.1} parent=55 // pred_region
        %p1158 = scmp.lt.s32.totalorder %s20, 1
        %s1159 = scalar_select %p1158, %s20, 1
        %s1160 = smul.addr %s1159, 2
        %s1161 = smul.addr %s1160, 8
        %s1162 = scalar_lea.vmem %s7, %s1161
      $region64: #{iconv2d_forward.1} parent=55 // pred_fallthru
        _
    $region56: #{iconv2d_forward.1} parent=5 // pred_fallthru
      _
  $region6: #{iconv2d_forward.1} parent=0 // loop_footer
    %s18 = sadd.s32 1, %s14
  $region7: #{iconv2d_forward.1} parent=0 // loop_footer_branch
    %13 = sbr.rel target = $region3
  $region8: #{iconv2d_forward.1} parent=0 // loop_exit
    _

</llo_original>
